<compile_context>
chip_gen: v5e
topology: v5e:2x2
jax: 0.10.0
libtpu: 0.0.40
codegen_flags: <defaults>
</compile_context>

<pallas_src>
import functools
import math

import jax
import jax.numpy as jnp
from jax.experimental import pallas as pl
from jax.experimental.pallas import tpu as pltpu


def _round_up(v, m):
    return (v + m - 1) // m * m


def _maybe_pad2(a, rows, cols):
    """Pad trailing rows/cols with zeros; no-op (no copy) when already aligned."""
    if rows or cols:
        return jnp.pad(a, ((0, rows), (0, cols)))
    return a


# --------------------------------------------------------------------------- #
# Stage 1: support = x @ W_gc   (computed once, stored bf16, lane-dense)
# --------------------------------------------------------------------------- #
def _support_kernel(x_ref, wgc_ref, s_ref):
    s_ref[...] = jnp.dot(
        x_ref[...], wgc_ref[...], preferred_element_type=jnp.float32
    ).astype(s_ref.dtype)


# --------------------------------------------------------------------------- #
# Stage 2: out = relu( (adj * w_mask) @ support + b )   (tiled over rows / K)
# --------------------------------------------------------------------------- #
def _agg_kernel(adj_ref, wmask_ref, s_ref, b_ref, o_ref, *, tk, support_resident):
    k = pl.program_id(1)

    # Output block index is constant across k -> o_ref is the VMEM-resident
    # f32 accumulator for the whole reduction (no extra scratch).
    @pl.when(k == 0)
    def _():
        o_ref[...] = jnp.zeros_like(o_ref)

    # Masked adjacency: f32 multiply on the VPU, one cast to bf16 for the MXU.
    a = (adj_ref[...] * wmask_ref[...]).astype(jnp.bfloat16)

    if support_resident:
        # Full support lives in VMEM; slice the K band for this step.
        off = pl.multiple_of(k * tk, tk)
        s = s_ref[pl.ds(off, tk), :]
    else:
        s = s_ref[...]

    o_ref[...] += jnp.dot(a, s, preferred_element_type=jnp.float32)

    @pl.when(k == pl.num_programs(1) - 1)
    def _():
        o_ref[...] = jnp.maximum(o_ref[...] + b_ref[...], 0.0)


# --------------------------------------------------------------------------- #
# Wrapper
# --------------------------------------------------------------------------- #
def subgcn_forward(
    x, adj, w_mask, w_gc, b_gc, *, tm=512, tk=1024,
    support_resident_budget=8 << 20,
):
    """Forward pass of subGCN (inference; dropout is identity).

    x      : [n, nfeat]   f32 node features
    adj    : [n, n]       f32 adjacency
    w_mask : [n, n]       f32 learnable adjacency mask (subGCN.weight)
    w_gc   : [nfeat,nhid] f32 GraphConvolution weight
    b_gc   : [nhid]       f32 GraphConvolution bias
    returns [n, nhid] f32
    """
    # TODO(synk): training-mode dropout would use pltpu.prng_seed /
    #             pltpu.prng_random_bits to build the keep mask in-kernel.
    n, nfeat = x.shape
    assert adj.shape == (n, n) and w_mask.shape == (n, n)
    nhid = w_gc.shape[1]

    # Lane-dense hidden dim (unmasked stores, full MXU N dim).
    nhid_p = _round_up(nhid, 128)

    # ---- tile selection ------------------------------------------------------
    # Row tile (sublane axis, multiple of 8).  Keep >= 2 row tiles when possible
    # so the "parallel" row axis can split across both TensorCores on v7x.
    tm = min(tm, _round_up(n, 8))
    if tm >= n and n > 8:
        tm = _round_up(-(-n // 2), 8)
    # Contraction tile (lane axis, multiple of 128).
    tk = min(tk, _round_up(n, 128))

    # Independent padding of the row and contraction axes (no lcm blow-up).
    n_pad_m = _round_up(n, tm)
    n_pad_k = _round_up(n, tk)

    # Stage-1 row tile: divides tk (hence n_pad_k), multiple of 8.
    ts = math.gcd(512, tk)

    # Zero padding keeps padded rows/cols inert (no leakage into real outputs).
    # adj / w_mask stay f32: streamed as-is, cast happens in-register in-kernel.
    adj_p = _maybe_pad2(adj, n_pad_m - n, n_pad_k - n)
    wm_p = _maybe_pad2(w_mask, n_pad_m - n, n_pad_k - n)
    x_p = _maybe_pad2(x, n_pad_k - n, 0)
    wgc_p = _maybe_pad2(w_gc, 0, nhid_p - nhid)
    b_p = _maybe_pad2(b_gc.reshape(1, nhid), 0, nhid_p - nhid)

    # ---- Stage 1: support = x @ W_gc (once; small, bf16, lane-dense) ---------
    support = pl.pallas_call(
        _support_kernel,
        out_shape=jax.ShapeDtypeStruct((n_pad_k, nhid_p), jnp.bfloat16),
        grid_spec=pltpu.PrefetchScalarGridSpec(
            num_scalar_prefetch=0,
            grid=(n_pad_k // ts,),
            in_specs=[
                pl.BlockSpec((ts, nfeat), lambda i: (i, 0)),
                pl.BlockSpec((nfeat, nhid_p), lambda i: (0, 0)),
            ],
            out_specs=pl.BlockSpec((ts, nhid_p), lambda i: (i, 0)),
        ),
        compiler_params=pltpu.CompilerParams(dimension_semantics=("parallel",)),
    )(x_p, wgc_p)

    # ---- Stage 2: tiled (adj * mask) @ support + bias, ReLU ------------------
    grid = (n_pad_m // tm, n_pad_k // tk)

    support_bytes = n_pad_k * nhid_p * 2  # bf16
    support_resident = (2 * support_bytes) <= support_resident_budget
    if support_resident:
        s_spec = pl.BlockSpec((n_pad_k, nhid_p), lambda i, k: (0, 0))
    else:
        s_spec = pl.BlockSpec((tk, nhid_p), lambda i, k: (k, 0))

    # Explicit VMEM budget: 2 double-buffered f32 streams + support + out + bias.
    vmem_bytes = (
        2 * 2 * tm * tk * 4
        + (2 * support_bytes if support_resident else 2 * tk * nhid_p * 2)
        + 2 * tm * nhid_p * 4
        + 2 * 8 * nhid_p * 4
    )
    vmem_limit = int(min(max(vmem_bytes + (8 << 20), 32 << 20), 100 << 20))

    support_reads = 1 if support_resident else grid[0]
    cost = pl.CostEstimate(
        flops=2 * n_pad_m * n_pad_k * nhid_p + n_pad_m * n_pad_k,
        transcendentals=0,
        bytes_accessed=(
            2 * n_pad_m * n_pad_k * 4              # adj + mask (f32 streams)
            + support_reads * n_pad_k * nhid_p * 2  # support (bf16)
            + n_pad_m * nhid_p * 4                  # output writeback (f32)
        ),
    )

    out_p = pl.pallas_call(
        functools.partial(_agg_kernel, tk=tk, support_resident=support_resident),
        out_shape=jax.ShapeDtypeStruct((n_pad_m, nhid_p), jnp.float32),
        grid_spec=pltpu.PrefetchScalarGridSpec(
            num_scalar_prefetch=0,
            grid=grid,
            in_specs=[
                pl.BlockSpec((tm, tk), lambda i, k: (i, k)),      # adj tile (f32)
                pl.BlockSpec((tm, tk), lambda i, k: (i, k)),      # mask tile (f32)
                s_spec,                                           # support
                pl.BlockSpec((1, nhid_p), lambda i, k: (0, 0)),   # bias (resident)
            ],
            out_specs=pl.BlockSpec((tm, nhid_p), lambda i, k: (i, 0)),
        ),
        compiler_params=pltpu.CompilerParams(
            dimension_semantics=("parallel", "arbitrary"),
            vmem_limit_bytes=vmem_limit,
        ),
        cost_estimate=cost,
    )(adj_p, wm_p, support, b_p)

    return out_p[:n, :nhid]


# --------------------------------------------------------------------------- #
# Parameter init mirroring PyTorch reset_parameters()
# --------------------------------------------------------------------------- #
def init_params(key, nfeat, nhid, n, bfs_limit):
    k_mask, k_w, k_b = jax.random.split(key, 3)

    # subGCN.weight ~ U(-stdv, stdv), stdv = (n / bfs_limit) / sqrt(n)
    bfs_agu = float(n) / float(bfs_limit)
    stdv_mask = bfs_agu / math.sqrt(n)
    w_mask = jax.random.uniform(
        k_mask, (n, n), jnp.float32, minval=-stdv_mask, maxval=stdv_mask
    )

    # GraphConvolution weight/bias ~ U(-stdv, stdv), stdv = 1 / sqrt(nhid)
    stdv_gc = 1.0 / math.sqrt(nhid)
    w_gc = jax.random.uniform(
        k_w, (nfeat, nhid), jnp.float32, minval=-stdv_gc, maxval=stdv_gc
    )
    b_gc = jax.random.uniform(
        k_b, (nhid,), jnp.float32, minval=-stdv_gc, maxval=stdv_gc
    )
    return w_mask, w_gc, b_gc


if __name__ == "__main__":
    key = jax.random.PRNGKey(0)
    # Non-tile-aligned n exercises the independent row/K padding paths.
    n, nfeat, nhid, bfs_limit = 500, 64, 16, 8

    k_x, k_adj, k_params = jax.random.split(key, 3)
    x = jax.random.normal(k_x, (n, nfeat), jnp.float32)
    adj = jax.random.uniform(k_adj, (n, n), jnp.float32)
    w_mask, w_gc, b_gc = init_params(k_params, nfeat, nhid, n, bfs_limit)

    # References.
    support_ref_f32 = x @ w_gc
    # Matches kernel precision: f32 mask product cast once to bf16, bf16 support,
    # f32 accumulation.
    a_bf = (adj * w_mask).astype(jnp.bfloat16)
    ref_bf = jnp.maximum(
        jnp.dot(a_bf, support_ref_f32.astype(jnp.bfloat16),
                preferred_element_type=jnp.float32) + b_gc.reshape(1, -1),
        0.0,
    )
    # Full-f32 PyTorch-equivalent math (loose semantic check).
    ref_f32 = jnp.maximum((adj * w_mask) @ support_ref_f32 + b_gc.reshape(1, -1), 0.0)

    # 1) Default configuration (resident support, large tiles, single K step).
    out = subgcn_forward(x, adj, w_mask, w_gc, b_gc)
    jax.block_until_ready(out)
    assert out.shape == (n, nhid)
    assert jnp.allclose(out, ref_bf, atol=1e-2, rtol=1e-2)
    rel_err = float(
        jnp.max(jnp.abs(out - ref_f32)) / (jnp.max(jnp.abs(ref_f32)) + 1e-6)
    )
    assert rel_err < 0.05, rel_err

    # 2) Small tiles + non-resident support: exercises the multi-step K
    #    accumulation path and the per-k support streaming fallback.
    out_small = subgcn_forward(
        x, adj, w_mask, w_gc, b_gc, tm=128, tk=128, support_resident_budget=0
    )
    jax.block_until_ready(out_small)
    assert out_small.shape == (n, nhid)
    assert jnp.allclose(out_small, ref_bf, atol=1e-2, rtol=1e-2)

    print("KERNEL_OK")
</pallas_src>

<mosaic_0001>
module attributes {stable_mosaic.version = 11 : i64} {
  func.func @_support_kernel(%arg0: i32, %arg1: memref<512x64xf32, #tpu.memory_space<vmem>>, %arg2: memref<64x128xf32, #tpu.memory_space<vmem>>, %arg3: memref<512x128xbf16, #tpu.memory_space<vmem>>) attributes {dimension_semantics = [#tpu.dimension_semantics<parallel>], iteration_bounds = array<i64: 1>, scalar_prefetch = 0 : i64, scratch_operands = 0 : i64, tpu.core_type = #tpu.core_type<tc>, window_params = [{transform_indices = @transform_0, window_bounds = array<i64: 512, 64>}, {pipeline_mode = #tpu.pipeline_mode<synchronous>, transform_indices = @transform_1, window_bounds = array<i64: 64, 128>}, {transform_indices = @transform_2, window_bounds = array<i64: 512, 128>}]} {
    %c0 = arith.constant 0 : index
    %c0_0 = arith.constant 0 : index
    %0 = vector.load %arg1[%c0, %c0_0] : memref<512x64xf32, #tpu.memory_space<vmem>>, vector<512x64xf32>
    %c0_1 = arith.constant 0 : index
    %c0_2 = arith.constant 0 : index
    %1 = vector.load %arg2[%c0_1, %c0_2] : memref<64x128xf32, #tpu.memory_space<vmem>>, vector<64x128xf32>
    %cst = arith.constant dense<0.000000e+00> : vector<512x128xf32>
    %2 = tpu.matmul %0, %1, %cst {dimension_numbers = #tpu.dot_dimension_numbers<[1], [0], [0], [1], [0, 0, 1, 1], [], []>} : vector<512x64xf32>, vector<64x128xf32>, vector<512x128xf32> -> vector<512x128xf32>
    %3 = arith.truncf %2 : vector<512x128xf32> to vector<512x128xbf16>
    %c0_3 = arith.constant 0 : index
    %c0_4 = arith.constant 0 : index
    %4 = vector.load %arg3[%c0_3, %c0_4] : memref<512x128xbf16, #tpu.memory_space<vmem>>, vector<512x128xbf16>
    tpu.vector_store %arg3[%c0_3, %c0_4], %3 {strides = array<i32>} : memref<512x128xbf16, #tpu.memory_space<vmem>>, vector<512x128xbf16>,
    return
  }
  func.func @transform_0(%arg0: i32) -> (i32, i32) {
    %c0_i32 = arith.constant 0 : i32
    %c0_i32_0 = arith.constant 0 : i32
    return %arg0, %c0_i32 : i32, i32
  }
  func.func @transform_1(%arg0: i32) -> (i32, i32) {
    %c0_i32 = arith.constant 0 : i32
    %c0_i32_0 = arith.constant 0 : i32
    %c0_i32_1 = arith.constant 0 : i32
    return %c0_i32, %c0_i32_0 : i32, i32
  }
  func.func @transform_2(%arg0: i32) -> (i32, i32) {
    %c0_i32 = arith.constant 0 : i32
    %c0_i32_0 = arith.constant 0 : i32
    return %arg0, %c0_i32 : i32, i32
  }
}

</mosaic_0001>

<llo_original>
// kernel: tpu_custom_call.1
$region0: #{tpu_custom_call.1}
  #allocation0 [shape = 'u32[]', space=smem, size = 0x4, offset = 0x4, fixed_abs, tag = 'smem constant byte address 0x4 - core index']
  #allocation1 [shape = 'u32[72,128]{1,0:T(1,128)}', space=vmem, size = 0x9000, scoped, tag = 'internal scratch']
  %s0 = inlined_call_operand.vmem [shape: f32[512,64], index: 0, kind: input, shape index: {}]
  %s1 = inlined_call_operand.vmem [shape: f32[64,128], index: 1, kind: input, shape index: {}]
  %s2 = inlined_call_operand.hbm [shape: bf16[512,128], index: 2, kind: output, shape index: {}]
  %s3 = sld [smem:[#allocation0]]
  $region18: #{tpu_custom_call.1} parent=0
    _
  %s5 = ssub.s32 1, %s3
  %s6 = scalar_select 0, %s5, %s3
  $region1: #{tpu_custom_call.1} parent=0
    #allocation2 [shape = 'u8[131072]{0}', space=vmem, size = 0x20000, scoped, tag = 'output window, operand 0, single buffered']
    #allocation3 [shape = 's32[1]{0}', space=sflag, size = 0x4, scoped, tag = 'scoped memory for tpu_custom_call.1']
    %7 = vsyncpa [#allocation3], 0
    // Predicated region
    $region2: #{tpu_custom_call.1} parent=1 // pred_check
      _
    $region3: #{tpu_custom_call.1} parent=1 // pred_check_branch
      %9 = sbr.rel (0) target = $region5
    $region4: #{tpu_custom_call.1} parent=1 // pred_region
      _
    $region5: #{tpu_custom_call.1} parent=1 // pred_fallthru
      _
    // Predicated region
    $region6: #{tpu_custom_call.1} parent=1 // pred_check
      _
    $region7: #{tpu_custom_call.1} parent=1 // pred_check_branch
      %11 = sbr.rel (0) target = $region9
    $region8: #{tpu_custom_call.1} parent=1 // pred_region
      _
    $region9: #{tpu_custom_call.1} parent=1 // pred_fallthru
      _
    %v12 = vld [vmem:[%s0] sm:$0xff]
    %v13 = vld [vmem:[%s0 + $0x8] sm:$0xff]
    %v14 = vld [vmem:[%s0 + $0x10] sm:$0xff]
    %v15 = vld [vmem:[%s0 + $0x18] sm:$0xff]
    %v16 = vld [vmem:[%s0 + $0x20] sm:$0xff]
    %v17 = vld [vmem:[%s0 + $0x28] sm:$0xff]
    %v18 = vld [vmem:[%s0 + $0x30] sm:$0xff]
    %v19 = vld [vmem:[%s0 + $0x38] sm:$0xff]
    %v20 = vld [vmem:[%s0 + $0x40] sm:$0xff]
    %v21 = vld [vmem:[%s0 + $0x48] sm:$0xff]
    %v22 = vld [vmem:[%s0 + $0x50] sm:$0xff]
    %v23 = vld [vmem:[%s0 + $0x58] sm:$0xff]
    %v24 = vld [vmem:[%s0 + $0x60] sm:$0xff]
    %v25 = vld [vmem:[%s0 + $0x68] sm:$0xff]
    %v26 = vld [vmem:[%s0 + $0x70] sm:$0xff]
    %v27 = vld [vmem:[%s0 + $0x78] sm:$0xff]
    %v28 = vld [vmem:[%s0 + $0x80] sm:$0xff]
    %v29 = vld [vmem:[%s0 + $0x88] sm:$0xff]
    %v30 = vld [vmem:[%s0 + $0x90] sm:$0xff]
    %v31 = vld [vmem:[%s0 + $0x98] sm:$0xff]
    %v32 = vld [vmem:[%s0 + $0xa0] sm:$0xff]
    %v33 = vld [vmem:[%s0 + $0xa8] sm:$0xff]
    %v34 = vld [vmem:[%s0 + $0xb0] sm:$0xff]
    %v35 = vld [vmem:[%s0 + $0xb8] sm:$0xff]
    %v36 = vld [vmem:[%s0 + $0xc0] sm:$0xff]
    %v37 = vld [vmem:[%s0 + $0xc8] sm:$0xff]
    %v38 = vld [vmem:[%s0 + $0xd0] sm:$0xff]
    %v39 = vld [vmem:[%s0 + $0xd8] sm:$0xff]
    %v40 = vld [vmem:[%s0 + $0xe0] sm:$0xff]
    %v41 = vld [vmem:[%s0 + $0xe8] sm:$0xff]
    %v42 = vld [vmem:[%s0 + $0xf0] sm:$0xff]
    %v43 = vld [vmem:[%s0 + $0xf8] sm:$0xff]
    %v44 = vld [vmem:[%s0 + $0x100] sm:$0xff]
    %v45 = vld [vmem:[%s0 + $0x108] sm:$0xff]
    %v46 = vld [vmem:[%s0 + $0x110] sm:$0xff]
    %v47 = vld [vmem:[%s0 + $0x118] sm:$0xff]
    %v48 = vld [vmem:[%s0 + $0x120] sm:$0xff]
    %v49 = vld [vmem:[%s0 + $0x128] sm:$0xff]
    %v50 = vld [vmem:[%s0 + $0x130] sm:$0xff]
    %v51 = vld [vmem:[%s0 + $0x138] sm:$0xff]
    %v52 = vld [vmem:[%s0 + $0x140] sm:$0xff]
    %v53 = vld [vmem:[%s0 + $0x148] sm:$0xff]
    %v54 = vld [vmem:[%s0 + $0x150] sm:$0xff]
    %v55 = vld [vmem:[%s0 + $0x158] sm:$0xff]
    %v56 = vld [vmem:[%s0 + $0x160] sm:$0xff]
    %v57 = vld [vmem:[%s0 + $0x168] sm:$0xff]
    %v58 = vld [vmem:[%s0 + $0x170] sm:$0xff]
    %v59 = vld [vmem:[%s0 + $0x178] sm:$0xff]
    %v60 = vld [vmem:[%s0 + $0x180] sm:$0xff]
    %v61 = vld [vmem:[%s0 + $0x188] sm:$0xff]
    %v62 = vld [vmem:[%s0 + $0x190] sm:$0xff]
    %v63 = vld [vmem:[%s0 + $0x198] sm:$0xff]
    %v64 = vld [vmem:[%s0 + $0x1a0] sm:$0xff]
    %v65 = vld [vmem:[%s0 + $0x1a8] sm:$0xff]
    %v66 = vld [vmem:[%s0 + $0x1b0] sm:$0xff]
    %v67 = vld [vmem:[%s0 + $0x1b8] sm:$0xff]
    %v68 = vld [vmem:[%s0 + $0x1c0] sm:$0xff]
    %v69 = vld [vmem:[%s0 + $0x1c8] sm:$0xff]
    %v70 = vld [vmem:[%s0 + $0x1d0] sm:$0xff]
    %v71 = vld [vmem:[%s0 + $0x1d8] sm:$0xff]
    %v72 = vld [vmem:[%s0 + $0x1e0] sm:$0xff]
    %v73 = vld [vmem:[%s0 + $0x1e8] sm:$0xff]
    %v74 = vld [vmem:[%s0 + $0x1f0] sm:$0xff]
    %v75 = vld [vmem:[%s0 + $0x1f8] sm:$0xff]
    %v76 = vld [vmem:[%s1] sm:$0xff]
    %v77 = vld [vmem:[%s1 + $0x8] sm:$0xff]
    %v78 = vld [vmem:[%s1 + $0x10] sm:$0xff]
    %v79 = vld [vmem:[%s1 + $0x18] sm:$0xff]
    %v80 = vld [vmem:[%s1 + $0x20] sm:$0xff]
    %v81 = vld [vmem:[%s1 + $0x28] sm:$0xff]
    %v82 = vld [vmem:[%s1 + $0x30] sm:$0xff]
    %v83 = vld [vmem:[%s1 + $0x38] sm:$0xff]
    %vm84 = vcmask 523264
    %v86 = vsel %vm84, %v12, 0
    %v89 = vsel %vm84, %v13, 0
    %v92 = vsel %vm84, %v14, 0
    %v95 = vsel %vm84, %v15, 0
    %v98 = vsel %vm84, %v16, 0
    %v101 = vsel %vm84, %v17, 0
    %v104 = vsel %vm84, %v18, 0
    %v107 = vsel %vm84, %v19, 0
    %v110 = vsel %vm84, %v20, 0
    %v113 = vsel %vm84, %v21, 0
    %v116 = vsel %vm84, %v22, 0
    %v119 = vsel %vm84, %v23, 0
    %v122 = vsel %vm84, %v24, 0
    %v125 = vsel %vm84, %v25, 0
    %v128 = vsel %vm84, %v26, 0
    %v131 = vsel %vm84, %v27, 0
    %v134 = vsel %vm84, %v28, 0
    %v137 = vsel %vm84, %v29, 0
    %v140 = vsel %vm84, %v30, 0
    %v143 = vsel %vm84, %v31, 0
    %v146 = vsel %vm84, %v32, 0
    %v149 = vsel %vm84, %v33, 0
    %v152 = vsel %vm84, %v34, 0
    %v155 = vsel %vm84, %v35, 0
    %v158 = vsel %vm84, %v36, 0
    %v161 = vsel %vm84, %v37, 0
    %v164 = vsel %vm84, %v38, 0
    %v167 = vsel %vm84, %v39, 0
    %v170 = vsel %vm84, %v40, 0
    %v173 = vsel %vm84, %v41, 0
    %v176 = vsel %vm84, %v42, 0
    %v179 = vsel %vm84, %v43, 0
    %v182 = vsel %vm84, %v44, 0
    %v185 = vsel %vm84, %v45, 0
    %v188 = vsel %vm84, %v46, 0
    %v191 = vsel %vm84, %v47, 0
    %v194 = vsel %vm84, %v48, 0
    %v197 = vsel %vm84, %v49, 0
    %v200 = vsel %vm84, %v50, 0
    %v203 = vsel %vm84, %v51, 0
    %v206 = vsel %vm84, %v52, 0
    %v209 = vsel %vm84, %v53, 0
    %v212 = vsel %vm84, %v54, 0
    %v215 = vsel %vm84, %v55, 0
    %v218 = vsel %vm84, %v56, 0
    %v221 = vsel %vm84, %v57, 0
    %v224 = vsel %vm84, %v58, 0
    %v227 = vsel %vm84, %v59, 0
    %v230 = vsel %vm84, %v60, 0
    %v233 = vsel %vm84, %v61, 0
    %v236 = vsel %vm84, %v62, 0
    %v239 = vsel %vm84, %v63, 0
    %v242 = vsel %vm84, %v64, 0
    %v245 = vsel %vm84, %v65, 0
    %v248 = vsel %vm84, %v66, 0
    %v251 = vsel %vm84, %v67, 0
    %v254 = vsel %vm84, %v68, 0
    %v257 = vsel %vm84, %v69, 0
    %v260 = vsel %vm84, %v70, 0
    %v263 = vsel %vm84, %v71, 0
    %v266 = vsel %vm84, %v72, 0
    %v269 = vsel %vm84, %v73, 0
    %v272 = vsel %vm84, %v74, 0
    %v275 = vsel %vm84, %v75, 0
    %277 = vmatpush.msra.mxu0 0.0
    %278 = vmatpush.msra.mxu0 0.0
    %279 = vmatpush.msra.mxu0 0.0
    %280 = vmatpush.msra.mxu0 0.0
    %281 = vmatpush.msra.mxu0 0.0
    %282 = vmatpush.msra.mxu0 0.0
    %283 = vmatpush.msra.mxu0 0.0
    %284 = vmatpush.msra.mxu0 0.0
    %285 = vmatpush.msra.mxu0 %v83
    %286 = vmatpush.msra.mxu0 %v82
    %287 = vmatpush.msra.mxu0 %v81
    %288 = vmatpush.msra.mxu0 %v80
    %289 = vmatpush.msra.mxu0 %v79
    %290 = vmatpush.msra.mxu0 %v78
    %291 = vmatpush.msra.mxu0 %v77
    %292 = vmatpush.msra.mxu0 %v76
    %293 = vmatmul.f32.gmra.mxu0 %v86
    %v294 = vpop.f32.mrf.mxu0
    %v295 = vadd.f32 0.0, %v294
    %296 = vmatmul.f32.gmra.mxu0 %v89
    %v297 = vpop.f32.mrf.mxu0
    %v298 = vadd.f32 0.0, %v297
    %299 = vmatmul.f32.gmra.mxu0 %v92
    %v300 = vpop.f32.mrf.mxu0
    %v301 = vadd.f32 0.0, %v300
    %302 = vmatmul.f32.gmra.mxu0 %v95
    %v303 = vpop.f32.mrf.mxu0
    %v304 = vadd.f32 0.0, %v303
    %305 = vmatmul.f32.gmra.mxu0 %v98
    %v306 = vpop.f32.mrf.mxu0
    %v307 = vadd.f32 0.0, %v306
    %308 = vmatmul.f32.gmra.mxu0 %v101
    %v309 = vpop.f32.mrf.mxu0
    %v310 = vadd.f32 0.0, %v309
    %311 = vmatmul.f32.gmra.mxu0 %v104
    %v312 = vpop.f32.mrf.mxu0
    %v313 = vadd.f32 0.0, %v312
    %314 = vmatmul.f32.gmra.mxu0 %v107
    %v315 = vpop.f32.mrf.mxu0
    %v316 = vadd.f32 0.0, %v315
    %317 = vmatmul.f32.gmra.mxu0 %v110
    %v318 = vpop.f32.mrf.mxu0
    %v319 = vadd.f32 0.0, %v318
    %320 = vmatmul.f32.gmra.mxu0 %v113
    %v321 = vpop.f32.mrf.mxu0
    %v322 = vadd.f32 0.0, %v321
    %323 = vmatmul.f32.gmra.mxu0 %v116
    %v324 = vpop.f32.mrf.mxu0
    %v325 = vadd.f32 0.0, %v324
    %326 = vmatmul.f32.gmra.mxu0 %v119
    %v327 = vpop.f32.mrf.mxu0
    %v328 = vadd.f32 0.0, %v327
    %329 = vmatmul.f32.gmra.mxu0 %v122
    %v330 = vpop.f32.mrf.mxu0
    %v331 = vadd.f32 0.0, %v330
    %332 = vmatmul.f32.gmra.mxu0 %v125
    %v333 = vpop.f32.mrf.mxu0
    %v334 = vadd.f32 0.0, %v333
    %335 = vmatmul.f32.gmra.mxu0 %v128
    %v336 = vpop.f32.mrf.mxu0
    %v337 = vadd.f32 0.0, %v336
    %338 = vmatmul.f32.gmra.mxu0 %v131
    %v339 = vpop.f32.mrf.mxu0
    %v340 = vadd.f32 0.0, %v339
    %341 = vmatmul.f32.gmra.mxu0 %v134
    %v342 = vpop.f32.mrf.mxu0
    %v343 = vadd.f32 0.0, %v342
    %344 = vmatmul.f32.gmra.mxu0 %v137
    %v345 = vpop.f32.mrf.mxu0
    %v346 = vadd.f32 0.0, %v345
    %347 = vmatmul.f32.gmra.mxu0 %v140
    %v348 = vpop.f32.mrf.mxu0
    %v349 = vadd.f32 0.0, %v348
    %350 = vmatmul.f32.gmra.mxu0 %v143
    %v351 = vpop.f32.mrf.mxu0
    %v352 = vadd.f32 0.0, %v351
    %353 = vmatmul.f32.gmra.mxu0 %v146
    %v354 = vpop.f32.mrf.mxu0
    %v355 = vadd.f32 0.0, %v354
    %356 = vmatmul.f32.gmra.mxu0 %v149
    %v357 = vpop.f32.mrf.mxu0
    %v358 = vadd.f32 0.0, %v357
    %359 = vmatmul.f32.gmra.mxu0 %v152
    %v360 = vpop.f32.mrf.mxu0
    %v361 = vadd.f32 0.0, %v360
    %362 = vmatmul.f32.gmra.mxu0 %v155
    %v363 = vpop.f32.mrf.mxu0
    %v364 = vadd.f32 0.0, %v363
    %365 = vmatmul.f32.gmra.mxu0 %v158
    %v366 = vpop.f32.mrf.mxu0
    %v367 = vadd.f32 0.0, %v366
    %368 = vmatmul.f32.gmra.mxu0 %v161
    %v369 = vpop.f32.mrf.mxu0
    %v370 = vadd.f32 0.0, %v369
    %371 = vmatmul.f32.gmra.mxu0 %v164
    %v372 = vpop.f32.mrf.mxu0
    %v373 = vadd.f32 0.0, %v372
    %374 = vmatmul.f32.gmra.mxu0 %v167
    %v375 = vpop.f32.mrf.mxu0
    %v376 = vadd.f32 0.0, %v375
    %377 = vmatmul.f32.gmra.mxu0 %v170
    %v378 = vpop.f32.mrf.mxu0
    %v379 = vadd.f32 0.0, %v378
    %380 = vmatmul.f32.gmra.mxu0 %v173
    %v381 = vpop.f32.mrf.mxu0
    %v382 = vadd.f32 0.0, %v381
    %383 = vmatmul.f32.gmra.mxu0 %v176
    %v384 = vpop.f32.mrf.mxu0
    %v385 = vadd.f32 0.0, %v384
    %386 = vmatmul.f32.gmra.mxu0 %v179
    %v387 = vpop.f32.mrf.mxu0
    %v388 = vadd.f32 0.0, %v387
    %389 = vmatmul.f32.gmra.mxu0 %v182
    %v390 = vpop.f32.mrf.mxu0
    %v391 = vadd.f32 0.0, %v390
    %392 = vmatmul.f32.gmra.mxu0 %v185
    %v393 = vpop.f32.mrf.mxu0
    %v394 = vadd.f32 0.0, %v393
    %395 = vmatmul.f32.gmra.mxu0 %v188
    %v396 = vpop.f32.mrf.mxu0
    %v397 = vadd.f32 0.0, %v396
    %398 = vmatmul.f32.gmra.mxu0 %v191
    %v399 = vpop.f32.mrf.mxu0
    %v400 = vadd.f32 0.0, %v399
    %401 = vmatmul.f32.gmra.mxu0 %v194
    %v402 = vpop.f32.mrf.mxu0
    %v403 = vadd.f32 0.0, %v402
    %404 = vmatmul.f32.gmra.mxu0 %v197
    %v405 = vpop.f32.mrf.mxu0
    %v406 = vadd.f32 0.0, %v405
    %407 = vmatmul.f32.gmra.mxu0 %v200
    %v408 = vpop.f32.mrf.mxu0
    %v409 = vadd.f32 0.0, %v408
    %410 = vmatmul.f32.gmra.mxu0 %v203
    %v411 = vpop.f32.mrf.mxu0
    %v412 = vadd.f32 0.0, %v411
    %413 = vmatmul.f32.gmra.mxu0 %v206
    %v414 = vpop.f32.mrf.mxu0
    %v415 = vadd.f32 0.0, %v414
    %416 = vmatmul.f32.gmra.mxu0 %v209
    %v417 = vpop.f32.mrf.mxu0
    %v418 = vadd.f32 0.0, %v417
    %419 = vmatmul.f32.gmra.mxu0 %v212
    %v420 = vpop.f32.mrf.mxu0
    %v421 = vadd.f32 0.0, %v420
    %422 = vmatmul.f32.gmra.mxu0 %v215
    %v423 = vpop.f32.mrf.mxu0
    %v424 = vadd.f32 0.0, %v423
    %425 = vmatmul.f32.gmra.mxu0 %v218
    %v426 = vpop.f32.mrf.mxu0
    %v427 = vadd.f32 0.0, %v426
    %428 = vmatmul.f32.gmra.mxu0 %v221
    %v429 = vpop.f32.mrf.mxu0
    %v430 = vadd.f32 0.0, %v429
    %431 = vmatmul.f32.gmra.mxu0 %v224
    %v432 = vpop.f32.mrf.mxu0
    %v433 = vadd.f32 0.0, %v432
    %434 = vmatmul.f32.gmra.mxu0 %v227
    %v435 = vpop.f32.mrf.mxu0
    %v436 = vadd.f32 0.0, %v435
    %437 = vmatmul.f32.gmra.mxu0 %v230
    %v438 = vpop.f32.mrf.mxu0
    %v439 = vadd.f32 0.0, %v438
    %440 = vmatmul.f32.gmra.mxu0 %v233
    %v441 = vpop.f32.mrf.mxu0
    %v442 = vadd.f32 0.0, %v441
    %443 = vmatmul.f32.gmra.mxu0 %v236
    %v444 = vpop.f32.mrf.mxu0
    %v445 = vadd.f32 0.0, %v444
    %446 = vmatmul.f32.gmra.mxu0 %v239
    %v447 = vpop.f32.mrf.mxu0
    %v448 = vadd.f32 0.0, %v447
    %449 = vmatmul.f32.gmra.mxu0 %v242
    %v450 = vpop.f32.mrf.mxu0
    %v451 = vadd.f32 0.0, %v450
    %452 = vmatmul.f32.gmra.mxu0 %v245
    %v453 = vpop.f32.mrf.mxu0
    %v454 = vadd.f32 0.0, %v453
    %455 = vmatmul.f32.gmra.mxu0 %v248
    %v456 = vpop.f32.mrf.mxu0
    %v457 = vadd.f32 0.0, %v456
    %458 = vmatmul.f32.gmra.mxu0 %v251
    %v459 = vpop.f32.mrf.mxu0
    %v460 = vadd.f32 0.0, %v459
    %461 = vmatmul.f32.gmra.mxu0 %v254
    %v462 = vpop.f32.mrf.mxu0
    %v463 = vadd.f32 0.0, %v462
    %464 = vmatmul.f32.gmra.mxu0 %v257
    %v465 = vpop.f32.mrf.mxu0
    %v466 = vadd.f32 0.0, %v465
    %467 = vmatmul.f32.gmra.mxu0 %v260
    %v468 = vpop.f32.mrf.mxu0
    %v469 = vadd.f32 0.0, %v468
    %470 = vmatmul.f32.gmra.mxu0 %v263
    %v471 = vpop.f32.mrf.mxu0
    %v472 = vadd.f32 0.0, %v471
    %473 = vmatmul.f32.gmra.mxu0 %v266
    %v474 = vpop.f32.mrf.mxu0
    %v475 = vadd.f32 0.0, %v474
    %476 = vmatmul.f32.gmra.mxu0 %v269
    %v477 = vpop.f32.mrf.mxu0
    %v478 = vadd.f32 0.0, %v477
    %479 = vmatmul.f32.gmra.mxu0 %v272
    %v480 = vpop.f32.mrf.mxu0
    %v481 = vadd.f32 0.0, %v480
    %482 = vmatmul.f32.gmra.mxu0 %v275
    %v483 = vpop.f32.mrf.mxu0
    %v484 = vadd.f32 0.0, %v483
    %485 = vdwg.mxu0
    %v486 = vpack.c.bf16 %v295, %v295
    %v487 = vpack.c.bf16 %v298, %v298
    %v488 = vpack.c.bf16 %v301, %v301
    %v489 = vpack.c.bf16 %v304, %v304
    %v490 = vpack.c.bf16 %v307, %v307
    %v491 = vpack.c.bf16 %v310, %v310
    %v492 = vpack.c.bf16 %v313, %v313
    %v493 = vpack.c.bf16 %v316, %v316
    %v494 = vpack.c.bf16 %v319, %v319
    %v495 = vpack.c.bf16 %v322, %v322
    %v496 = vpack.c.bf16 %v325, %v325
    %v497 = vpack.c.bf16 %v328, %v328
    %v498 = vpack.c.bf16 %v331, %v331
    %v499 = vpack.c.bf16 %v334, %v334
    %v500 = vpack.c.bf16 %v337, %v337
    %v501 = vpack.c.bf16 %v340, %v340
    %v502 = vpack.c.bf16 %v343, %v343
    %v503 = vpack.c.bf16 %v346, %v346
    %v504 = vpack.c.bf16 %v349, %v349
    %v505 = vpack.c.bf16 %v352, %v352
    %v506 = vpack.c.bf16 %v355, %v355
    %v507 = vpack.c.bf16 %v358, %v358
    %v508 = vpack.c.bf16 %v361, %v361
    %v509 = vpack.c.bf16 %v364, %v364
    %v510 = vpack.c.bf16 %v367, %v367
    %v511 = vpack.c.bf16 %v370, %v370
    %v512 = vpack.c.bf16 %v373, %v373
    %v513 = vpack.c.bf16 %v376, %v376
    %v514 = vpack.c.bf16 %v379, %v379
    %v515 = vpack.c.bf16 %v382, %v382
    %v516 = vpack.c.bf16 %v385, %v385
    %v517 = vpack.c.bf16 %v388, %v388
    %v518 = vpack.c.bf16 %v391, %v391
    %v519 = vpack.c.bf16 %v394, %v394
    %v520 = vpack.c.bf16 %v397, %v397
    %v521 = vpack.c.bf16 %v400, %v400
    %v522 = vpack.c.bf16 %v403, %v403
    %v523 = vpack.c.bf16 %v406, %v406
    %v524 = vpack.c.bf16 %v409, %v409
    %v525 = vpack.c.bf16 %v412, %v412
    %v526 = vpack.c.bf16 %v415, %v415
    %v527 = vpack.c.bf16 %v418, %v418
    %v528 = vpack.c.bf16 %v421, %v421
    %v529 = vpack.c.bf16 %v424, %v424
    %v530 = vpack.c.bf16 %v427, %v427
    %v531 = vpack.c.bf16 %v430, %v430
    %v532 = vpack.c.bf16 %v433, %v433
    %v533 = vpack.c.bf16 %v436, %v436
    %v534 = vpack.c.bf16 %v439, %v439
    %v535 = vpack.c.bf16 %v442, %v442
    %v536 = vpack.c.bf16 %v445, %v445
    %v537 = vpack.c.bf16 %v448, %v448
    %v538 = vpack.c.bf16 %v451, %v451
    %v539 = vpack.c.bf16 %v454, %v454
    %v540 = vpack.c.bf16 %v457, %v457
    %v541 = vpack.c.bf16 %v460, %v460
    %v542 = vpack.c.bf16 %v463, %v463
    %v543 = vpack.c.bf16 %v466, %v466
    %v544 = vpack.c.bf16 %v469, %v469
    %v545 = vpack.c.bf16 %v472, %v472
    %v546 = vpack.c.bf16 %v475, %v475
    %v547 = vpack.c.bf16 %v478, %v478
    %v548 = vpack.c.bf16 %v481, %v481
    %v549 = vpack.c.bf16 %v484, %v484
    %550 = vst [vmem:[#allocation2] sm:$0xf] %v486
    %551 = vst [vmem:[#allocation2 + $0x4] sm:$0xf] %v487
    %552 = vst [vmem:[#allocation2 + $0x8] sm:$0xf] %v488
    %553 = vst [vmem:[#allocation2 + $0xc] sm:$0xf] %v489
    %554 = vst [vmem:[#allocation2 + $0x10] sm:$0xf] %v490
    %555 = vst [vmem:[#allocation2 + $0x14] sm:$0xf] %v491
    %556 = vst [vmem:[#allocation2 + $0x18] sm:$0xf] %v492
    %557 = vst [vmem:[#allocation2 + $0x1c] sm:$0xf] %v493
    %558 = vst [vmem:[#allocation2 + $0x20] sm:$0xf] %v494
    %559 = vst [vmem:[#allocation2 + $0x24] sm:$0xf] %v495
    %560 = vst [vmem:[#allocation2 + $0x28] sm:$0xf] %v496
    %561 = vst [vmem:[#allocation2 + $0x2c] sm:$0xf] %v497
    %562 = vst [vmem:[#allocation2 + $0x30] sm:$0xf] %v498
    %563 = vst [vmem:[#allocation2 + $0x34] sm:$0xf] %v499
    %564 = vst [vmem:[#allocation2 + $0x38] sm:$0xf] %v500
    %565 = vst [vmem:[#allocation2 + $0x3c] sm:$0xf] %v501
    %566 = vst [vmem:[#allocation2 + $0x40] sm:$0xf] %v502
    %567 = vst [vmem:[#allocation2 + $0x44] sm:$0xf] %v503
    %568 = vst [vmem:[#allocation2 + $0x48] sm:$0xf] %v504
    %569 = vst [vmem:[#allocation2 + $0x4c] sm:$0xf] %v505
    %570 = vst [vmem:[#allocation2 + $0x50] sm:$0xf] %v506
    %571 = vst [vmem:[#allocation2 + $0x54] sm:$0xf] %v507
    %572 = vst [vmem:[#allocation2 + $0x58] sm:$0xf] %v508
    %573 = vst [vmem:[#allocation2 + $0x5c] sm:$0xf] %v509
    %574 = vst [vmem:[#allocation2 + $0x60] sm:$0xf] %v510
    %575 = vst [vmem:[#allocation2 + $0x64] sm:$0xf] %v511
    %576 = vst [vmem:[#allocation2 + $0x68] sm:$0xf] %v512
    %577 = vst [vmem:[#allocation2 + $0x6c] sm:$0xf] %v513
    %578 = vst [vmem:[#allocation2 + $0x70] sm:$0xf] %v514
    %579 = vst [vmem:[#allocation2 + $0x74] sm:$0xf] %v515
    %580 = vst [vmem:[#allocation2 + $0x78] sm:$0xf] %v516
    %581 = vst [vmem:[#allocation2 + $0x7c] sm:$0xf] %v517
    %582 = vst [vmem:[#allocation2 + $0x80] sm:$0xf] %v518
    %583 = vst [vmem:[#allocation2 + $0x84] sm:$0xf] %v519
    %584 = vst [vmem:[#allocation2 + $0x88] sm:$0xf] %v520
    %585 = vst [vmem:[#allocation2 + $0x8c] sm:$0xf] %v521
    %586 = vst [vmem:[#allocation2 + $0x90] sm:$0xf] %v522
    %587 = vst [vmem:[#allocation2 + $0x94] sm:$0xf] %v523
    %588 = vst [vmem:[#allocation2 + $0x98] sm:$0xf] %v524
    %589 = vst [vmem:[#allocation2 + $0x9c] sm:$0xf] %v525
    %590 = vst [vmem:[#allocation2 + $0xa0] sm:$0xf] %v526
    %591 = vst [vmem:[#allocation2 + $0xa4] sm:$0xf] %v527
    %592 = vst [vmem:[#allocation2 + $0xa8] sm:$0xf] %v528
    %593 = vst [vmem:[#allocation2 + $0xac] sm:$0xf] %v529
    %594 = vst [vmem:[#allocation2 + $0xb0] sm:$0xf] %v530
    %595 = vst [vmem:[#allocation2 + $0xb4] sm:$0xf] %v531
    %596 = vst [vmem:[#allocation2 + $0xb8] sm:$0xf] %v532
    %597 = vst [vmem:[#allocation2 + $0xbc] sm:$0xf] %v533
    %598 = vst [vmem:[#allocation2 + $0xc0] sm:$0xf] %v534
    %599 = vst [vmem:[#allocation2 + $0xc4] sm:$0xf] %v535
    %600 = vst [vmem:[#allocation2 + $0xc8] sm:$0xf] %v536
    %601 = vst [vmem:[#allocation2 + $0xcc] sm:$0xf] %v537
    %602 = vst [vmem:[#allocation2 + $0xd0] sm:$0xf] %v538
    %603 = vst [vmem:[#allocation2 + $0xd4] sm:$0xf] %v539
    %604 = vst [vmem:[#allocation2 + $0xd8] sm:$0xf] %v540
    %605 = vst [vmem:[#allocation2 + $0xdc] sm:$0xf] %v541
    %606 = vst [vmem:[#allocation2 + $0xe0] sm:$0xf] %v542
    %607 = vst [vmem:[#allocation2 + $0xe4] sm:$0xf] %v543
    %608 = vst [vmem:[#allocation2 + $0xe8] sm:$0xf] %v544
    %609 = vst [vmem:[#allocation2 + $0xec] sm:$0xf] %v545
    %610 = vst [vmem:[#allocation2 + $0xf0] sm:$0xf] %v546
    %611 = vst [vmem:[#allocation2 + $0xf4] sm:$0xf] %v547
    %612 = vst [vmem:[#allocation2 + $0xf8] sm:$0xf] %v548
    %613 = vst [vmem:[#allocation2 + $0xfc] sm:$0xf] %v549
    // Predicated region
    $region10: #{tpu_custom_call.1} parent=1 // pred_check
      _
    $region11: #{tpu_custom_call.1} parent=1 // pred_check_branch
      %615 = sbr.rel (0) target = $region13
    $region12: #{tpu_custom_call.1} parent=1 // pred_region
      %617 = vsyncadd [#allocation3], 0
      %s618 = sshll.u32 [#allocation2], 4
      %s619 = int_to_ptr.vmem [resolvable:$true] %s618
      %s620 = sshll.u32 %s2, 4
      %s621 = int_to_ptr.hbm [resolvable:$true] %s620
      %626 = dma.vmem_to_hbm [thread:$0]  %s619, 4096, %s621, [#allocation3], 64, 64, 4
    $region13: #{tpu_custom_call.1} parent=1 // pred_fallthru
      _
    // Predicated region
    $region14: #{tpu_custom_call.1} parent=1 // pred_check
      _
    $region15: #{tpu_custom_call.1} parent=1 // pred_check_branch
      %628 = sbr.rel (0) target = $region17
    $region16: #{tpu_custom_call.1} parent=1 // pred_region
      %630 = dma.done [#allocation3], 4096
    $region17: #{tpu_custom_call.1} parent=1 // pred_fallthru
      _
    %631 = vsyncpa [#allocation3], 1

</llo_original>
